<compile_context>
chip_gen: v6e
topology: v6e:2x2x1
jax: 0.10.0
libtpu: 0.0.40
codegen_flags: <defaults>
</compile_context>

<pallas_src>
import functools

import jax
import jax.numpy as jnp
from jax.experimental import pallas as pl
from jax.experimental.pallas import tpu as pltpu


# ---------------------------------------------------------------------------
# shared in-kernel helpers
# ---------------------------------------------------------------------------
def _scores(fq, fk, use_bf16):
    """s[i,j] = fq[i,:] . fk[j,:] via MXU, contracting dim 1 of both operands
    (no explicit transpose), f32 accumulation."""
    if use_bf16:
        fq = fq.astype(jnp.bfloat16)
        fk = fk.astype(jnp.bfloat16)
    return jax.lax.dot_general(
        fq, fk, dimension_numbers=(((1,), (1,)), ((), ())),
        preferred_element_type=jnp.float32)


def _mean_log_prob_pos(s, pos_mask_f, off_diag):
    """Per-row mean log prob over positives, without materializing log_prob:
    sum_j m*log_prob = sum_j m*s - logsumexp_{j!=i}(s) * sum_j m."""
    s_max = jnp.max(s, axis=1, keepdims=True)                       # [R,1]
    e = jnp.where(off_diag, jnp.exp(s - s_max), 0.0)                # [R,C]
    log_z = s_max + jnp.log(jnp.sum(e, axis=1, keepdims=True))      # [R,1]
    pos_dot = jnp.sum(pos_mask_f * s, axis=1, keepdims=True)        # [R,1]
    mask_sum = jnp.sum(pos_mask_f, axis=1, keepdims=True)           # [R,1]
    return (pos_dot - log_z * mask_sum) / (mask_sum + 1e-05)        # [R,1]


# ---------------------------------------------------------------------------
# kernels
# ---------------------------------------------------------------------------
def _label_loss_small_kernel(lab_col_ref, lab_row_ref, feat_ref, out_ref, *,
                             inv_temp, use_bf16):
    """Monolithic (grid-less) path for small N; mask built in-kernel.
    Emits per-row mean-log-prob-pos [N,1]."""
    f = feat_ref[...]                                   # [N, Dp] f32
    n = f.shape[0]
    s = _scores(f * inv_temp, f, use_bf16)              # [N, N]

    row = jax.lax.broadcasted_iota(jnp.int32, (n, n), 0)
    col = jax.lax.broadcasted_iota(jnp.int32, (n, n), 1)
    off_diag = row != col
    pos = jnp.logical_and(lab_col_ref[...] == lab_row_ref[...], off_diag)
    out_ref[...] = _mean_log_prob_pos(s, jnp.where(pos, 1.0, 0.0), off_diag)


def _label_loss_mask_kernel(mask_ref, feat_ref, out_ref, *, inv_temp,
                            use_bf16):
    """Monolithic path for an explicit (possibly asymmetric) user mask."""
    f = feat_ref[...]                                   # [N, Dp]
    n = f.shape[0]
    s = _scores(f * inv_temp, f, use_bf16)              # [N, N]

    row = jax.lax.broadcasted_iota(jnp.int32, (n, n), 0)
    col = jax.lax.broadcasted_iota(jnp.int32, (n, n), 1)
    off_diag = row != col
    m = jnp.where(off_diag, mask_ref[...], 0.0)
    out_ref[...] = _mean_log_prob_pos(s, m, off_diag)


def _label_loss_tiled_kernel(lab_col_ref, lab_row_ref, fq_ref, fk_ref, out_ref,
                             m_sc, d_sc, p_sc, c_sc, *, inv_temp, tq, tk,
                             use_bf16):
    """Flash-style tiled path: grid=(N/TQ, N/TK); the column axis is the
    reduction (online logsumexp + positive sums kept in VMEM scratch)."""
    i = pl.program_id(0)
    k = pl.program_id(1)

    @pl.when(k == 0)
    def _():
        m_sc[...] = jnp.full(m_sc.shape, -jnp.inf, jnp.float32)
        d_sc[...] = jnp.zeros(d_sc.shape, jnp.float32)
        p_sc[...] = jnp.zeros(p_sc.shape, jnp.float32)
        c_sc[...] = jnp.zeros(c_sc.shape, jnp.float32)

    s = _scores(fq_ref[...] * inv_temp, fk_ref[...], use_bf16)       # [tq, tk]

    row_g = i * tq + jax.lax.broadcasted_iota(jnp.int32, (tq, tk), 0)
    col_g = k * tk + jax.lax.broadcasted_iota(jnp.int32, (tq, tk), 1)
    off_diag = row_g != col_g
    pos = jnp.logical_and(lab_col_ref[...] == lab_row_ref[...], off_diag)
    mf = jnp.where(pos, 1.0, 0.0)

    # Online logsumexp over off-diagonal entries (stabilizer may include the
    # diagonal, matching the reference's row-max; exact once the max is added
    # back at the end).
    m_prev = m_sc[...]
    m_new = jnp.maximum(m_prev, jnp.max(s, axis=1, keepdims=True))
    alpha = jnp.exp(m_prev - m_new)
    e = jnp.where(off_diag, jnp.exp(s - m_new), 0.0)
    d_sc[...] = alpha * d_sc[...] + jnp.sum(e, axis=1, keepdims=True)
    m_sc[...] = m_new

    p_sc[...] = p_sc[...] + jnp.sum(mf * s, axis=1, keepdims=True)
    c_sc[...] = c_sc[...] + jnp.sum(mf, axis=1, keepdims=True)

    @pl.when(k == pl.num_programs(1) - 1)
    def _():
        log_z = m_sc[...] + jnp.log(d_sc[...])
        out_ref[...] = (p_sc[...] - log_z * c_sc[...]) / (c_sc[...] + 1e-05)


# ---------------------------------------------------------------------------
# wrapper
# ---------------------------------------------------------------------------
def label_loss(features, labels=None, mask=None, *, temperature=0.07,
               contrast_mode='all', base_temperature=0.07,
               use_bf16_matmul=False):
    """JAX/Pallas equivalent of LabelLoss.forward (defaults reproduced)."""
    if features.ndim < 3:
        raise ValueError('`features` needs to be [bsz, n_views, ...]')
    if features.ndim > 3:
        features = features.reshape(features.shape[0], features.shape[1], -1)
    bsz, n_views, dim = features.shape
    if contrast_mode not in ('one', 'all'):
        raise ValueError(f'Unknown mode: {contrast_mode}')
    if n_views != 1:
        # TODO(synk): the reference forward errors for n_views > 1 (mask is
        # never repeated before use); only n_views == 1 is supported here.
        raise ValueError('only n_views == 1 is runnable in the reference code')
    if labels is not None and mask is not None:
        raise ValueError('Cannot define both `labels` and `mask`')

    n = bsz
    # contrast_feature with n_views==1 is just [bsz, dim]; 'one' == 'all'.
    f = features.reshape(n, dim).astype(jnp.float32)

    # Zero-pad feature dim to a multiple of 128 (exact for F·F^T; full vregs).
    dp = ((dim + 127) // 128) * 128
    if dp != dim:
        f = jnp.pad(f, ((0, 0), (0, dp - dim)))

    inv_temp = float(1.0 / temperature)
    loss_scale = float(-(temperature / base_temperature))

    # --- explicit-mask case: monolithic kernel with the mask as an input ----
    if mask is not None:
        # TODO(synk): explicit asymmetric masks keep the monolithic path (the
        # [N,N] mask must fit VMEM); tile like the label path for large N.
        m = jnp.asarray(mask, dtype=jnp.float32)
        per_row = pl.pallas_call(
            functools.partial(_label_loss_mask_kernel, inv_temp=inv_temp,
                              use_bf16=use_bf16_matmul),
            out_shape=jax.ShapeDtypeStruct((n, 1), jnp.float32),
            in_specs=[
                pl.BlockSpec((n, n), lambda: (0, 0)),
                pl.BlockSpec((n, dp), lambda: (0, 0)),
            ],
            out_specs=pl.BlockSpec((n, 1), lambda: (0, 0)),
        )(m, f)
        return loss_scale * jnp.sum(per_row) / n

    # --- label-based (or SimCLR eye == labels=arange) cases -----------------
    if labels is None:
        labels = jnp.arange(n, dtype=jnp.int32)   # eye mask == unique labels
    else:
        labels = labels.reshape(-1)
        if labels.shape[0] != n:
            raise ValueError('Num of labels does not match num of features')
        labels = labels.astype(jnp.int32)

    lab_col = labels.reshape(n, 1)
    lab_row = labels.reshape(1, n)

    if n >= 512 and n % 128 == 0:
        # Tiled / online-softmax path; never materializes the N*N scores.
        tk = 512 if n % 512 == 0 else (256 if n % 256 == 0 else 128)
        tq = 256 if n % 256 == 0 else 128
        per_row = pl.pallas_call(
            functools.partial(_label_loss_tiled_kernel, inv_temp=inv_temp,
                              tq=tq, tk=tk, use_bf16=use_bf16_matmul),
            out_shape=jax.ShapeDtypeStruct((n, 1), jnp.float32),
            grid_spec=pltpu.PrefetchScalarGridSpec(
                num_scalar_prefetch=0,
                grid=(n // tq, n // tk),
                in_specs=[
                    pl.BlockSpec((tq, 1), lambda i, k: (i, 0)),   # labels (rows)
                    pl.BlockSpec((1, tk), lambda i, k: (0, k)),   # labels (cols)
                    pl.BlockSpec((tq, dp), lambda i, k: (i, 0)),  # F (query side)
                    pl.BlockSpec((tk, dp), lambda i, k: (k, 0)),  # F (key side)
                ],
                out_specs=pl.BlockSpec((tq, 1), lambda i, k: (i, 0)),
                scratch_shapes=[pltpu.VMEM((tq, 1), jnp.float32)] * 4,
            ),
            compiler_params=pltpu.CompilerParams(
                dimension_semantics=("parallel", "arbitrary")),
            cost_estimate=pl.CostEstimate(
                flops=2 * n * n * dp,
                transcendentals=n * n,
                bytes_accessed=2 * n * dp * 4 + 2 * n * 4 + n * 4),
        )(lab_col, lab_row, f, f)
        return loss_scale * jnp.sum(per_row) / n

    # Small-N path: single grid-less block (tiling below ~512 only adds
    # per-step overhead; the N*N score tile fits VMEM comfortably).
    per_row = pl.pallas_call(
        functools.partial(_label_loss_small_kernel, inv_temp=inv_temp,
                          use_bf16=use_bf16_matmul),
        out_shape=jax.ShapeDtypeStruct((n, 1), jnp.float32),
        in_specs=[
            pl.BlockSpec((n, 1), lambda: (0, 0)),
            pl.BlockSpec((1, n), lambda: (0, 0)),
            pl.BlockSpec((n, dp), lambda: (0, 0)),
        ],
        out_specs=pl.BlockSpec((n, 1), lambda: (0, 0)),
    )(lab_col, lab_row, f)
    return loss_scale * jnp.sum(per_row) / n


# ---------------------------------------------------------------------------
# pure-JAX reference (mirrors the PyTorch code) for verification
# ---------------------------------------------------------------------------
def _label_loss_ref(features, labels, *, temperature=0.07,
                    base_temperature=0.07):
    bsz = features.shape[0]
    f = features.reshape(bsz, features.shape[1], -1)[:, 0].astype(jnp.float32)
    labels = labels.reshape(-1, 1)
    mask = (labels == labels.T).astype(jnp.float32)
    adc = (f @ f.T) / temperature
    logits = adc - jnp.max(adc, axis=1, keepdims=True)
    logits_mask = 1.0 - jnp.eye(bsz, dtype=jnp.float32)
    mask = mask * logits_mask
    exp_logits = jnp.exp(logits) * logits_mask
    log_prob = logits - jnp.log(jnp.sum(exp_logits, axis=1, keepdims=True))
    mean_log_prob_pos = jnp.sum(mask * log_prob, axis=1) / (
        jnp.sum(mask, axis=1) + 1e-05)
    loss = -(temperature / base_temperature) * mean_log_prob_pos
    return jnp.mean(loss)


if __name__ == "__main__":
    key = jax.random.PRNGKey(0)
    k1, k2, k3, k4 = jax.random.split(key, 4)

    # Small case -> monolithic single-block kernel.
    bsz, n_views, dim = 8, 1, 32
    feats = jax.random.normal(k1, (bsz, n_views, dim), dtype=jnp.float32)
    feats = feats / jnp.linalg.norm(feats, axis=-1, keepdims=True)
    labels = jax.random.randint(k2, (bsz,), 0, 3, dtype=jnp.int32)
    out_small = jax.block_until_ready(label_loss(feats, labels=labels))
    ref_small = _label_loss_ref(feats, labels)
    assert jnp.allclose(out_small, ref_small, rtol=1e-3, atol=1e-3), (
        out_small, ref_small)

    # Larger case -> tiled online-softmax kernel (grid=(2,1), TQ=256, TK=512).
    bsz2, dim2 = 512, 32
    feats2 = jax.random.normal(k3, (bsz2, 1, dim2), dtype=jnp.float32)
    feats2 = feats2 / jnp.linalg.norm(feats2, axis=-1, keepdims=True)
    labels2 = jax.random.randint(k4, (bsz2,), 0, 10, dtype=jnp.int32)
    out_big = jax.block_until_ready(label_loss(feats2, labels=labels2))
    ref_big = _label_loss_ref(feats2, labels2)
    assert jnp.allclose(out_big, ref_big, rtol=1e-3, atol=1e-3), (
        out_big, ref_big)

    print("KERNEL_OK")
</pallas_src>

<mosaic_0001>
module attributes {stable_mosaic.version = 11 : i64} {
  func.func @_label_loss_small_kernel(%arg0: memref<8x1xi32, #tpu.memory_space<vmem>>, %arg1: memref<1x8xi32, #tpu.memory_space<vmem>>, %arg2: memref<8x128xf32, #tpu.memory_space<vmem>>, %arg3: memref<8x1xf32, #tpu.memory_space<vmem>>) attributes {dimension_semantics = [], scalar_prefetch = 0 : i64, scratch_operands = 0 : i64, tpu.core_type = #tpu.core_type<tc>} {
    %c0 = arith.constant 0 : index
    %c0_0 = arith.constant 0 : index
    %0 = vector.load %arg2[%c0, %c0_0] : memref<8x128xf32, #tpu.memory_space<vmem>>, vector<8x128xf32>
    %cst = arith.constant 14.2857141 : f32
    %1 = vector.broadcast %cst : f32 to vector<8x128xf32>
    %2 = arith.mulf %0, %1 : vector<8x128xf32>
    %cst_1 = arith.constant dense<0.000000e+00> : vector<8x8xf32>
    %3 = tpu.matmul %2, %0, %cst_1 {dimension_numbers = #tpu.dot_dimension_numbers<[1], [1], [0], [0], [0, 0, 1, 0], [], []>} : vector<8x128xf32>, vector<8x128xf32>, vector<8x8xf32> -> vector<8x8xf32>
    %4 = tpu.iota {dimensions = array<i32: 0>} : vector<8x8xi32>
    %5 = tpu.iota {dimensions = array<i32: 1>} : vector<8x8xi32>
    %6 = arith.cmpi ne, %4, %5 : vector<8x8xi32>
    %c0_2 = arith.constant 0 : index
    %c0_3 = arith.constant 0 : index
    %7 = vector.load %arg0[%c0_2, %c0_3] : memref<8x1xi32, #tpu.memory_space<vmem>>, vector<8x1xi32>
    %c0_4 = arith.constant 0 : index
    %c0_5 = arith.constant 0 : index
    %8 = vector.load %arg1[%c0_4, %c0_5] : memref<1x8xi32, #tpu.memory_space<vmem>>, vector<1x8xi32>
    %9 = vector.broadcast %7 : vector<8x1xi32> to vector<8x8xi32>
    %10 = vector.broadcast %8 : vector<1x8xi32> to vector<8x8xi32>
    %11 = arith.cmpi eq, %9, %10 : vector<8x8xi32>
    %12 = arith.andi %11, %6 : vector<8x8xi1>
    %cst_6 = arith.constant 1.000000e+00 : f32
    %cst_7 = arith.constant 0.000000e+00 : f32
    %13 = vector.broadcast %cst_6 : f32 to vector<8x8xf32>
    %14 = vector.broadcast %cst_7 : f32 to vector<8x8xf32>
    %15 = arith.select %12, %13, %14 : vector<8x8xi1>, vector<8x8xf32>
    %cst_8 = arith.constant dense<0xFF800000> : vector<8xf32>
    %16 = vector.multi_reduction <maximumf>, %3, %cst_8 [1] : vector<8x8xf32> to vector<8xf32>
    %17 = vector.shape_cast %16 : vector<8xf32> to vector<8x1xf32>
    %18 = vector.broadcast %17 : vector<8x1xf32> to vector<8x8xf32>
    %19 = arith.subf %3, %18 : vector<8x8xf32>
    %20 = math.exp %19 : vector<8x8xf32>
    %cst_9 = arith.constant 0.000000e+00 : f32
    %21 = vector.broadcast %cst_9 : f32 to vector<8x8xf32>
    %22 = arith.select %6, %20, %21 : vector<8x8xi1>, vector<8x8xf32>
    %cst_10 = arith.constant dense<0.000000e+00> : vector<8xf32>
    %23 = vector.multi_reduction <add>, %22, %cst_10 [1] : vector<8x8xf32> to vector<8xf32>
    %24 = vector.shape_cast %23 : vector<8xf32> to vector<8x1xf32>
    %25 = math.log %24 : vector<8x1xf32>
    %26 = arith.addf %17, %25 : vector<8x1xf32>
    %27 = arith.mulf %15, %3 : vector<8x8xf32>
    %cst_11 = arith.constant dense<0.000000e+00> : vector<8xf32>
    %28 = vector.multi_reduction <add>, %27, %cst_11 [1] : vector<8x8xf32> to vector<8xf32>
    %29 = vector.shape_cast %28 : vector<8xf32> to vector<8x1xf32>
    %cst_12 = arith.constant dense<0.000000e+00> : vector<8xf32>
    %30 = vector.multi_reduction <add>, %15, %cst_12 [1] : vector<8x8xf32> to vector<8xf32>
    %31 = vector.shape_cast %30 : vector<8xf32> to vector<8x1xf32>
    %32 = arith.mulf %26, %31 : vector<8x1xf32>
    %33 = arith.subf %29, %32 : vector<8x1xf32>
    %cst_13 = arith.constant 9.99999974E-6 : f32
    %34 = vector.broadcast %cst_13 : f32 to vector<8x1xf32>
    %35 = arith.addf %31, %34 : vector<8x1xf32>
    %36 = arith.divf %33, %35 : vector<8x1xf32>
    %c0_14 = arith.constant 0 : index
    %c0_15 = arith.constant 0 : index
    %37 = vector.load %arg3[%c0_14, %c0_15] : memref<8x1xf32, #tpu.memory_space<vmem>>, vector<8x1xf32>
    tpu.vector_store %arg3[%c0_14, %c0_15], %36 {strides = array<i32>} : memref<8x1xf32, #tpu.memory_space<vmem>>, vector<8x1xf32>,
    return
  }
}

</mosaic_0001>

<llo_original>
// kernel: tpu_custom_call.1
$region0: #{tpu_custom_call.1}
  #allocation0 [shape = 'u32[]', space=smem, size = 0x4, offset = 0x4, fixed_abs, tag = 'smem constant byte address 0x4 - core index']
  #allocation1 [shape = 'u32[144,128]{1,0:T(1,128)}', space=vmem, size = 0x12000, scoped, tag = 'internal scratch']
  %s0 = inlined_call_operand.vmem [shape: s32[8,1], index: 0, kind: input, shape index: {}]
  %s1 = inlined_call_operand.vmem [shape: s32[1,8], index: 1, kind: input, shape index: {}]
  %s2 = inlined_call_operand.vmem [shape: f32[8,128], index: 2, kind: input, shape index: {}]
  %s3 = inlined_call_operand.vmem [shape: f32[8,1], index: 3, kind: output, shape index: {}]
  %s4 = sld [smem:[#allocation0]]
  $region22: #{tpu_custom_call.1} parent=0
    _
  %s6 = ssub.s32 1, %s4
  %s7 = scalar_select 0, %s6, %s4
  // Predicated region
  $region2: #{tpu_custom_call.1} parent=0 // pred_check
    _
  $region3: #{tpu_custom_call.1} parent=0 // pred_check_branch
    %9 = sbr.rel (0) target = $region5
  $region4: #{tpu_custom_call.1} parent=0 // pred_region
    _
  $region5: #{tpu_custom_call.1} parent=0 // pred_fallthru
    _
  // Predicated region
  $region6: #{tpu_custom_call.1} parent=0 // pred_check
    _
  $region7: #{tpu_custom_call.1} parent=0 // pred_check_branch
    %11 = sbr.rel (0) target = $region9
  $region8: #{tpu_custom_call.1} parent=0 // pred_region
    _
  $region9: #{tpu_custom_call.1} parent=0 // pred_fallthru
    _
  // Predicated region
  $region10: #{tpu_custom_call.1} parent=0 // pred_check
    _
  $region11: #{tpu_custom_call.1} parent=0 // pred_check_branch
    %13 = sbr.rel (0) target = $region13
  $region12: #{tpu_custom_call.1} parent=0 // pred_region
    _
  $region13: #{tpu_custom_call.1} parent=0 // pred_fallthru
    _
  %v14 = vld [vmem:[%s2] sm:$0xff]
  %v15 = vmul.f32 %v14, 14.285714
  %16 = vmatprep.subr.mxu0 0.0
  %17 = vmatpush1.xpose.msra.mxu0 0.0
  %18 = vmatprep.subr.mxu0 0.0
  %19 = vmatpush1.xpose.msra.mxu0 0.0
  %20 = vmatprep.subr.mxu0 0.0
  %21 = vmatpush1.xpose.msra.mxu0 0.0
  %22 = vmatprep.subr.mxu0 0.0
  %23 = vmatpush1.xpose.msra.mxu0 0.0
  %24 = vmatprep.subr.mxu0 0.0
  %25 = vmatpush1.xpose.msra.mxu0 0.0
  %26 = vmatprep.subr.mxu0 0.0
  %27 = vmatpush1.xpose.msra.mxu0 0.0
  %28 = vmatprep.subr.mxu0 0.0
  %29 = vmatpush1.xpose.msra.mxu0 0.0
  %30 = vmatprep.subr.mxu0 0.0
  %31 = vmatpush1.xpose.msra.mxu0 0.0
  %32 = vmatprep.subr.mxu0 0.0
  %33 = vmatpush1.xpose.msra.mxu0 0.0
  %34 = vmatprep.subr.mxu0 0.0
  %35 = vmatpush1.xpose.msra.mxu0 0.0
  %36 = vmatprep.subr.mxu0 0.0
  %37 = vmatpush1.xpose.msra.mxu0 0.0
  %38 = vmatprep.subr.mxu0 0.0
  %39 = vmatpush1.xpose.msra.mxu0 0.0
  %40 = vmatprep.subr.mxu0 0.0
  %41 = vmatpush1.xpose.msra.mxu0 0.0
  %42 = vmatprep.subr.mxu0 0.0
  %43 = vmatpush1.xpose.msra.mxu0 0.0
  %44 = vmatprep.subr.mxu0 0.0
  %45 = vmatpush1.xpose.msra.mxu0 0.0
  %46 = vmatprep.subr.mxu0 0.0
  %47 = vmatpush1.xpose.msra.mxu0 %v14
  %48 = vmatprep.subr.mxu0 0.0
  %49 = vmatpush2.xpose.msra.mxu0 0.0
  %50 = vmatprep.subr.mxu0 0.0
  %51 = vmatpush2.xpose.msra.mxu0 0.0
  %52 = vmatprep.subr.mxu0 0.0
  %53 = vmatpush2.xpose.msra.mxu0 0.0
  %54 = vmatprep.subr.mxu0 0.0
  %55 = vmatpush2.xpose.msra.mxu0 0.0
  %56 = vmatprep.subr.mxu0 0.0
  %57 = vmatpush2.xpose.msra.mxu0 0.0
  %58 = vmatprep.subr.mxu0 0.0
  %59 = vmatpush2.xpose.msra.mxu0 0.0
  %60 = vmatprep.subr.mxu0 0.0
  %61 = vmatpush2.xpose.msra.mxu0 0.0
  %62 = vmatprep.subr.mxu0 0.0
  %63 = vmatpush2.xpose.msra.mxu0 0.0
  %64 = vmatprep.subr.mxu0 0.0
  %65 = vmatpush2.xpose.msra.mxu0 0.0
  %66 = vmatprep.subr.mxu0 0.0
  %67 = vmatpush2.xpose.msra.mxu0 0.0
  %68 = vmatprep.subr.mxu0 0.0
  %69 = vmatpush2.xpose.msra.mxu0 0.0
  %70 = vmatprep.subr.mxu0 0.0
  %71 = vmatpush2.xpose.msra.mxu0 0.0
  %72 = vmatprep.subr.mxu0 0.0
  %73 = vmatpush2.xpose.msra.mxu0 0.0
  %74 = vmatprep.subr.mxu0 0.0
  %75 = vmatpush2.xpose.msra.mxu0 0.0
  %76 = vmatprep.subr.mxu0 0.0
  %77 = vmatpush2.xpose.msra.mxu0 0.0
  %78 = vmatprep.subr.mxu0 0.0
  %79 = vmatpush2.xpose.msra.mxu0 0.0
  %80 = vmatprep.mubr.f32.mxu0 0.0
  %81 = vmatmul.mubr.f32.gmra.mxu0 %v15
  %v82 = vpop.f32.mrf.mxu0
  %v83 = vadd.f32 0.0, %v82
  %v84 = vpop.f32.mrf.mxu0
  %85 = vdwg.mxu0
  %v86 = vlaneseq
  %v87 = vshrl.u32 %v86, 7
  %v88 = vlaneseq
  %v89 = vand.u32 %v88, 127
  %vm90 = vcmp.ne.s32.totalorder %v87, %v89
  %v91 = vld [vmem:[%s0] sm:$0xff]
  %v92 = vld [vmem:[%s1] sm:$0x1]
  %93 = vset.pattern.permute.xlu0 0
  %94 = vperm.xlu0 %93, %v91
  %v95 = vpop.permute.xlu0 %94
  %v96 = vlaneseq
  %v97 = vshrl.u32 %v96, 7
  %v98 = vsub.s32 0, %v97
  %v99 = vrot.slane %v92, %v98
  %vm100 = vcmp.eq.s32.totalorder %v95, %v99
  %vm101 = vmand %vm100, %vm90
  %v102 = vsel %vm101, 1.0, 0.0
  %vm103 = vcmask 64512
  %v104 = vsel %vm103, %v83, -inf
  %105 = vmax.xlane.f32.xlu0 %v104
  %v106 = vpop.xlane.xlu0 %105
  %v107 = vsub.f32 %v83, %v106
  %v108 = vmul.f32 %v107, 1.442695
  %v109 = vpow.pop %v108
  %v110 = vsel %vm90, %v109, 0.0
  %v111 = vsel %vm103, %v110, 0.0
  %112 = vadd.xlane.f32.xlu0 %v111
  %v113 = vpop.xlane.xlu0 %112
  %v114 = vlog2.pop %v113
  %v115 = vmul.f32 %v114, 0.6931472
  %v116 = vadd.f32 %v106, %v115
  %v117 = vmul.f32 %v102, %v83
  %v118 = vsel %vm103, %v117, 0.0
  %119 = vadd.xlane.f32.xlu0 %v118
  %v120 = vpop.xlane.xlu0 %119
  %v121 = vsel %vm103, %v102, 0.0
  %122 = vadd.xlane.f32.xlu0 %v121
  %v123 = vpop.xlane.xlu0 %122
  %v124 = vmul.f32 %v116, %v123
  %v125 = vsub.f32 %v120, %v124
  %v126 = vadd.f32 %v123, 1e-05
  %v127 = vrcp.pop %v126
  %v128 = vmul.f32 %v125, %v127
  %vm129 = vcmask 7168
  %130 = vst.msk [vmem:[%s3] sm:$0xff] %vm129, %v128
  // Predicated region
  $region14: #{tpu_custom_call.1} parent=0 // pred_check
    _
  $region15: #{tpu_custom_call.1} parent=0 // pred_check_branch
    %132 = sbr.rel (0) target = $region17
  $region16: #{tpu_custom_call.1} parent=0 // pred_region
    _
  $region17: #{tpu_custom_call.1} parent=0 // pred_fallthru
    _
  // Predicated region
  $region18: #{tpu_custom_call.1} parent=0 // pred_check
    _
  $region19: #{tpu_custom_call.1} parent=0 // pred_check_branch
    %134 = sbr.rel (0) target = $region21
  $region20: #{tpu_custom_call.1} parent=0 // pred_region
    _
  $region21: #{tpu_custom_call.1} parent=0 // pred_fallthru
    _

</llo_original>
